<compile_context>
chip_gen: v7x
topology: tpu7x:2x2x1
jax: 0.10.0
libtpu: 0.0.40
codegen_flags: <defaults>
</compile_context>

<pallas_src>
import functools

import jax
import jax.numpy as jnp
from jax import lax
from jax.experimental import pallas as pl
from jax.experimental.pallas import tpu as pltpu

LANES = 128
ROW_BLOCK_ELEMS = 8 * LANES   # keep rows % 8 == 0 so the (rows//8,8,128) fold is legal

# Per-generation tiling.  tile_rows=8192 -> 4 MiB per input block per grid
# step; two inputs double-buffered = 16 MiB of pipeline VMEM + ~8 KiB of
# accumulators.
#   v5e: 16 MiB default scoped VMEM -> raise the limit (128 MiB physical, safe).
#   v6e: fits the 32 MiB default scoped VMEM, no flag needed.
#   v7x: 64 MiB physical / 32 MiB default; raise slightly for headroom and
#        enable the 2-TensorCore shard axis.
_CONFIGS = {
    "v5e":     dict(tile_rows=8192, shards=1, vmem_limit=32 << 20),
    "v6e":     dict(tile_rows=8192, shards=1, vmem_limit=None),
    "v7x":     dict(tile_rows=8192, shards=2, vmem_limit=48 << 20),
    "unknown": dict(tile_rows=2048, shards=1, vmem_limit=None),
}


def _chip_flavor():
    try:
        kind = jax.devices()[0].device_kind.lower()
    except Exception:
        return "unknown"
    if "v5 lite" in kind or "v5e" in kind or "v5lite" in kind:
        return "v5e"
    if "v6" in kind:
        return "v6e"
    if "7x" in kind or "v7" in kind:
        return "v7x"
    return "unknown"


def _dice_kernel(p_ref, t_ref, o_ref, inter_acc, denom_acc, *, rows):
    """Per-shard partial sums of p*t and p+t.

    Grid: (shard [parallel], row-tile within shard [arbitrary]).
    inter_acc / denom_acc: (8, 128) f32 VMEM accumulators (one vreg each);
    each step folds its (tile_rows, 128) block into (8, 128) with VPU adds.
    o_ref block (1, 8, LANES): sublane 0 = sum(p*t), sublane 1 = sum(p+t).
    """
    s = pl.program_id(0)
    j = pl.program_id(1)
    tiles_per_shard = pl.num_programs(1)

    @pl.when(j == 0)
    def _init():
        inter_acc[...] = jnp.zeros_like(inter_acc)
        denom_acc[...] = jnp.zeros_like(denom_acc)

    tile_rows = p_ref.shape[0]           # static; multiple of 8 by construction
    sub = tile_rows // 8
    g = s * tiles_per_shard + j          # global row-tile index
    valid = rows - g * tile_rows         # #valid rows in this tile

    p = p_ref[...].astype(jnp.float32)
    t = t_ref[...].astype(jnp.float32)

    def _fold(x):                        # (tile_rows, 128) -> (8, 128), VPU-only adds
        return x.reshape(sub, 8, LANES).sum(axis=0)

    @pl.when(valid >= tile_rows)         # fast path: full tile, no mask work
    def _full():
        inter_acc[...] += _fold(p * t)
        denom_acc[...] += _fold(p + t)

    @pl.when(valid < tile_rows)          # ragged last tile / clamped overhang tile
    def _ragged():
        row_ids = lax.broadcasted_iota(jnp.int32, (tile_rows, LANES), 0)
        mask = row_ids < valid
        inter_acc[...] += _fold(jnp.where(mask, p * t, 0.0))
        denom_acc[...] += _fold(jnp.where(mask, p + t, 0.0))

    @pl.when(j == tiles_per_shard - 1)
    def _finalize():
        si = jnp.sum(inter_acc[...])     # the one cross-lane reduce per shard
        sd = jnp.sum(denom_acc[...])
        rid = lax.broadcasted_iota(jnp.int32, (8, LANES), 0)
        o_ref[0] = jnp.where(rid == 0, si, jnp.where(rid == 1, sd, 0.0))


def dice_loss(predict, target, smooth=1.0):
    """1 - (2*sum(p*t)+smooth)/(sum(p)+sum(t)+smooth), matching DiceLoss."""
    assert predict.shape == target.shape
    # Callers may pass bf16/int8 inputs straight through (halves HBM traffic);
    # the kernel upcasts to f32 before accumulating.
    p_flat = predict.reshape(-1)
    t_flat = target.reshape(-1)
    n = p_flat.shape[0]

    # Process the 1024-aligned prefix in the kernel (keeps rows % 8 == 0 so
    # the in-kernel vreg fold is always legal); the <1024-element tail is
    # handled exactly in plain JAX below.  No full-array padding/copies.
    n_main = (n // ROW_BLOCK_ELEMS) * ROW_BLOCK_ELEMS
    rows = n_main // LANES

    inter = jnp.float32(0.0)
    denom = jnp.float32(0.0)

    if rows > 0:
        cfg = _CONFIGS[_chip_flavor()]
        p2 = p_flat[:n_main].reshape(rows, LANES)
        t2 = t_flat[:n_main].reshape(rows, LANES)

        tile_rows = min(cfg["tile_rows"], rows)   # both multiples of 8 -> legal block
        num_row_tiles = pl.cdiv(rows, tile_rows)
        num_shards = min(cfg["shards"], num_row_tiles)
        tiles_per_shard = pl.cdiv(num_row_tiles, num_shards)

        def in_map(s, j):
            g = s * tiles_per_shard + j
            # Clamp overhang tiles (fully masked in-kernel) to a valid block.
            return (jnp.minimum(g, num_row_tiles - 1), 0)

        in_bytes = n_main * (jnp.dtype(p2.dtype).itemsize
                             + jnp.dtype(t2.dtype).itemsize)
        cost = pl.CostEstimate(
            flops=3 * n_main,
            transcendentals=0,
            bytes_accessed=in_bytes + num_shards * 8 * LANES * 4,
        )

        cp_kwargs = dict(dimension_semantics=("parallel", "arbitrary"))
        if cfg["vmem_limit"] is not None:
            cp_kwargs["vmem_limit_bytes"] = cfg["vmem_limit"]

        partials = pl.pallas_call(
            functools.partial(_dice_kernel, rows=rows),
            out_shape=jax.ShapeDtypeStruct((num_shards, 8, LANES), jnp.float32),
            grid_spec=pltpu.PrefetchScalarGridSpec(
                num_scalar_prefetch=0,
                grid=(num_shards, tiles_per_shard),
                in_specs=[
                    pl.BlockSpec((tile_rows, LANES), in_map),
                    pl.BlockSpec((tile_rows, LANES), in_map),
                ],
                out_specs=pl.BlockSpec((1, 8, LANES), lambda s, j: (s, 0, 0)),
                scratch_shapes=[
                    pltpu.VMEM((8, LANES), jnp.float32),   # inter partial (1 vreg)
                    pltpu.VMEM((8, LANES), jnp.float32),   # denom partial (1 vreg)
                ],
            ),
            compiler_params=pltpu.CompilerParams(**cp_kwargs),
            cost_estimate=cost,
        )(p2, t2)

        inter = inter + jnp.sum(partials[:, 0, 0])
        denom = denom + jnp.sum(partials[:, 1, 0])

    if n_main != n:
        p_tail = p_flat[n_main:].astype(jnp.float32)
        t_tail = t_flat[n_main:].astype(jnp.float32)
        inter = inter + jnp.sum(p_tail * t_tail)
        denom = denom + jnp.sum(p_tail + t_tail)

    smooth = jnp.float32(smooth)
    dice = (2.0 * inter + smooth) / (denom + smooth)
    return 1.0 - dice


def dice_loss_ref(predict, target):
    p = predict.reshape(-1).astype(jnp.float32)
    t = target.reshape(-1).astype(jnp.float32)
    smooth = 1.0
    inter = jnp.sum(p * t)
    dice = (2.0 * inter + smooth) / (jnp.sum(p) + jnp.sum(t) + smooth)
    return 1.0 - dice


if __name__ == "__main__":
    key = jax.random.PRNGKey(0)
    kp, kt = jax.random.split(key)
    # NCHW-shaped inputs, like a segmentation prediction / mask.
    predict = jax.random.uniform(kp, (2, 4, 16, 16), dtype=jnp.float32)
    target = (jax.random.uniform(kt, (2, 4, 16, 16)) > 0.5).astype(jnp.float32)

    loss = dice_loss(predict, target)
    jax.block_until_ready(loss)
    ref = dice_loss_ref(predict, target)
    assert jnp.allclose(loss, ref, rtol=1e-5, atol=1e-6), (loss, ref)

    # Ragged shape: exercises the exact-JAX tail path (n not a multiple of 1024).
    kp2, kt2 = jax.random.split(kt)
    predict2 = jax.random.uniform(kp2, (3, 5, 17, 13), dtype=jnp.float32)
    target2 = (jax.random.uniform(kt2, (3, 5, 17, 13)) > 0.5).astype(jnp.float32)
    loss2 = dice_loss(predict2, target2)
    jax.block_until_ready(loss2)
    ref2 = dice_loss_ref(predict2, target2)
    assert jnp.allclose(loss2, ref2, rtol=1e-5, atol=1e-6), (loss2, ref2)

    print("KERNEL_OK")
</pallas_src>

<mosaic_0001>
module attributes {stable_mosaic.version = 11 : i64} {
  func.func @_dice_kernel(%arg0: i32, %arg1: i32, %arg2: memref<16x128xf32, #tpu.memory_space<vmem>>, %arg3: memref<16x128xf32, #tpu.memory_space<vmem>>, %arg4: memref<1x8x128xf32, #tpu.memory_space<vmem>>, %arg5: memref<8x128xf32, #tpu.memory_space<vmem>>, %arg6: memref<8x128xf32, #tpu.memory_space<vmem>>) attributes {dimension_semantics = [#tpu.dimension_semantics<parallel>, #tpu.dimension_semantics<arbitrary>], iteration_bounds = array<i64: 1, 1>, scalar_prefetch = 0 : i64, scratch_operands = 2 : i64, tpu.core_type = #tpu.core_type<tc>, window_params = [{transform_indices = @transform_0, window_bounds = array<i64: 16, 128>}, {transform_indices = @transform_1, window_bounds = array<i64: 16, 128>}, {transform_indices = @transform_2, window_bounds = array<i64: 1, 8, 128>}]} {
    %c0_i32 = arith.constant 0 : i32
    %0 = arith.cmpi eq, %arg1, %c0_i32 : i32
    %1 = arith.extui %0 : i1 to i32
    %c0_i32_0 = arith.constant 0 : i32
    %2 = arith.cmpi ne, %1, %c0_i32_0 : i32
    scf.if %2 {
      %cst = arith.constant 0.000000e+00 : f32
      %18 = vector.broadcast %cst : f32 to vector<8x128xf32>
      %c0_11 = arith.constant 0 : index
      %c0_12 = arith.constant 0 : index
      %19 = vector.load %arg5[%c0_11, %c0_12] : memref<8x128xf32, #tpu.memory_space<vmem>>, vector<8x128xf32>
      tpu.vector_store %arg5[%c0_11, %c0_12], %18 {strides = array<i32>} : memref<8x128xf32, #tpu.memory_space<vmem>>, vector<8x128xf32>,
      %cst_13 = arith.constant 0.000000e+00 : f32
      %20 = vector.broadcast %cst_13 : f32 to vector<8x128xf32>
      %c0_14 = arith.constant 0 : index
      %c0_15 = arith.constant 0 : index
      %21 = vector.load %arg6[%c0_14, %c0_15] : memref<8x128xf32, #tpu.memory_space<vmem>>, vector<8x128xf32>
      tpu.vector_store %arg6[%c0_14, %c0_15], %20 {strides = array<i32>} : memref<8x128xf32, #tpu.memory_space<vmem>>, vector<8x128xf32>,
    } else {
    }
    %c1_i32 = arith.constant 1 : i32
    %3 = arith.muli %arg0, %c1_i32 : i32
    %4 = arith.addi %3, %arg1 : i32
    %c16_i32 = arith.constant 16 : i32
    %5 = arith.muli %4, %c16_i32 : i32
    %c16_i32_1 = arith.constant 16 : i32
    %6 = arith.subi %c16_i32_1, %5 : i32
    %c0 = arith.constant 0 : index
    %c0_2 = arith.constant 0 : index
    %7 = vector.load %arg2[%c0, %c0_2] : memref<16x128xf32, #tpu.memory_space<vmem>>, vector<16x128xf32>
    %c0_3 = arith.constant 0 : index
    %c0_4 = arith.constant 0 : index
    %8 = vector.load %arg3[%c0_3, %c0_4] : memref<16x128xf32, #tpu.memory_space<vmem>>, vector<16x128xf32>
    %c16_i32_5 = arith.constant 16 : i32
    %9 = arith.cmpi sge, %6, %c16_i32_5 : i32
    %10 = arith.extui %9 : i1 to i32
    %c0_i32_6 = arith.constant 0 : i32
    %11 = arith.cmpi ne, %10, %c0_i32_6 : i32
    scf.if %11 {
      %c0_11 = arith.constant 0 : index
      %c0_12 = arith.constant 0 : index
      %18 = vector.load %arg5[%c0_11, %c0_12] : memref<8x128xf32, #tpu.memory_space<vmem>>, vector<8x128xf32>
      %19 = arith.mulf %7, %8 : vector<16x128xf32>
      %20 = vector.shape_cast %19 : vector<16x128xf32> to vector<2x8x128xf32>
      %cst = arith.constant dense<0.000000e+00> : vector<8x128xf32>
      %21 = vector.multi_reduction <add>, %20, %cst [0] : vector<2x8x128xf32> to vector<8x128xf32>
      %22 = arith.addf %18, %21 : vector<8x128xf32>
      %c0_13 = arith.constant 0 : index
      %c0_14 = arith.constant 0 : index
      %23 = vector.load %arg5[%c0_13, %c0_14] : memref<8x128xf32, #tpu.memory_space<vmem>>, vector<8x128xf32>
      tpu.vector_store %arg5[%c0_13, %c0_14], %22 {strides = array<i32>} : memref<8x128xf32, #tpu.memory_space<vmem>>, vector<8x128xf32>,
      %c0_15 = arith.constant 0 : index
      %c0_16 = arith.constant 0 : index
      %24 = vector.load %arg6[%c0_15, %c0_16] : memref<8x128xf32, #tpu.memory_space<vmem>>, vector<8x128xf32>
      %25 = arith.addf %7, %8 : vector<16x128xf32>
      %26 = vector.shape_cast %25 : vector<16x128xf32> to vector<2x8x128xf32>
      %cst_17 = arith.constant dense<0.000000e+00> : vector<8x128xf32>
      %27 = vector.multi_reduction <add>, %26, %cst_17 [0] : vector<2x8x128xf32> to vector<8x128xf32>
      %28 = arith.addf %24, %27 : vector<8x128xf32>
      %c0_18 = arith.constant 0 : index
      %c0_19 = arith.constant 0 : index
      %29 = vector.load %arg6[%c0_18, %c0_19] : memref<8x128xf32, #tpu.memory_space<vmem>>, vector<8x128xf32>
      tpu.vector_store %arg6[%c0_18, %c0_19], %28 {strides = array<i32>} : memref<8x128xf32, #tpu.memory_space<vmem>>, vector<8x128xf32>,
    } else {
    }
    %c16_i32_7 = arith.constant 16 : i32
    %12 = arith.cmpi slt, %6, %c16_i32_7 : i32
    %13 = arith.extui %12 : i1 to i32
    %c0_i32_8 = arith.constant 0 : i32
    %14 = arith.cmpi ne, %13, %c0_i32_8 : i32
    scf.if %14 {
      %18 = tpu.iota {dimensions = array<i32: 0>} : vector<16x128xi32>
      %19 = vector.broadcast %6 : i32 to vector<16x128xi32>
      %20 = arith.cmpi slt, %18, %19 : vector<16x128xi32>
      %c0_11 = arith.constant 0 : index
      %c0_12 = arith.constant 0 : index
      %21 = vector.load %arg5[%c0_11, %c0_12] : memref<8x128xf32, #tpu.memory_space<vmem>>, vector<8x128xf32>
      %22 = arith.mulf %7, %8 : vector<16x128xf32>
      %cst = arith.constant 0.000000e+00 : f32
      %23 = vector.broadcast %cst : f32 to vector<16x128xf32>
      %24 = arith.select %20, %22, %23 : vector<16x128xi1>, vector<16x128xf32>
      %25 = vector.shape_cast %24 : vector<16x128xf32> to vector<2x8x128xf32>
      %cst_13 = arith.constant dense<0.000000e+00> : vector<8x128xf32>
      %26 = vector.multi_reduction <add>, %25, %cst_13 [0] : vector<2x8x128xf32> to vector<8x128xf32>
      %27 = arith.addf %21, %26 : vector<8x128xf32>
      %c0_14 = arith.constant 0 : index
      %c0_15 = arith.constant 0 : index
      %28 = vector.load %arg5[%c0_14, %c0_15] : memref<8x128xf32, #tpu.memory_space<vmem>>, vector<8x128xf32>
      tpu.vector_store %arg5[%c0_14, %c0_15], %27 {strides = array<i32>} : memref<8x128xf32, #tpu.memory_space<vmem>>, vector<8x128xf32>,
      %c0_16 = arith.constant 0 : index
      %c0_17 = arith.constant 0 : index
      %29 = vector.load %arg6[%c0_16, %c0_17] : memref<8x128xf32, #tpu.memory_space<vmem>>, vector<8x128xf32>
      %30 = arith.addf %7, %8 : vector<16x128xf32>
      %cst_18 = arith.constant 0.000000e+00 : f32
      %31 = vector.broadcast %cst_18 : f32 to vector<16x128xf32>
      %32 = arith.select %20, %30, %31 : vector<16x128xi1>, vector<16x128xf32>
      %33 = vector.shape_cast %32 : vector<16x128xf32> to vector<2x8x128xf32>
      %cst_19 = arith.constant dense<0.000000e+00> : vector<8x128xf32>
      %34 = vector.multi_reduction <add>, %33, %cst_19 [0] : vector<2x8x128xf32> to vector<8x128xf32>
      %35 = arith.addf %29, %34 : vector<8x128xf32>
      %c0_20 = arith.constant 0 : index
      %c0_21 = arith.constant 0 : index
      %36 = vector.load %arg6[%c0_20, %c0_21] : memref<8x128xf32, #tpu.memory_space<vmem>>, vector<8x128xf32>
      tpu.vector_store %arg6[%c0_20, %c0_21], %35 {strides = array<i32>} : memref<8x128xf32, #tpu.memory_space<vmem>>, vector<8x128xf32>,
    } else {
    }
    %c0_i32_9 = arith.constant 0 : i32
    %15 = arith.cmpi eq, %arg1, %c0_i32_9 : i32
    %16 = arith.extui %15 : i1 to i32
    %c0_i32_10 = arith.constant 0 : i32
    %17 = arith.cmpi ne, %16, %c0_i32_10 : i32
    scf.if %17 {
      %c0_11 = arith.constant 0 : index
      %c0_12 = arith.constant 0 : index
      %18 = vector.load %arg5[%c0_11, %c0_12] : memref<8x128xf32, #tpu.memory_space<vmem>>, vector<8x128xf32>
      %19 = vector.shape_cast %18 : vector<8x128xf32> to vector<1x8x128xf32>
      %cst = arith.constant dense<0.000000e+00> : vector<1xf32>
      %20 = vector.multi_reduction <add>, %19, %cst [1, 2] : vector<1x8x128xf32> to vector<1xf32>
      %21 = vector.shape_cast %20 : vector<1xf32> to vector<1x1x1xf32>
      %22 = vector.extract %21[0, 0, 0] : f32 from vector<1x1x1xf32>
      %c0_13 = arith.constant 0 : index
      %c0_14 = arith.constant 0 : index
      %23 = vector.load %arg6[%c0_13, %c0_14] : memref<8x128xf32, #tpu.memory_space<vmem>>, vector<8x128xf32>
      %24 = vector.shape_cast %23 : vector<8x128xf32> to vector<1x8x128xf32>
      %cst_15 = arith.constant dense<0.000000e+00> : vector<1xf32>
      %25 = vector.multi_reduction <add>, %24, %cst_15 [1, 2] : vector<1x8x128xf32> to vector<1xf32>
      %26 = vector.shape_cast %25 : vector<1xf32> to vector<1x1x1xf32>
      %27 = vector.extract %26[0, 0, 0] : f32 from vector<1x1x1xf32>
      %28 = tpu.iota {dimensions = array<i32: 0>} : vector<8x128xi32>
      %c0_i32_16 = arith.constant 0 : i32
      %29 = vector.broadcast %c0_i32_16 : i32 to vector<8x128xi32>
      %30 = arith.cmpi eq, %28, %29 : vector<8x128xi32>
      %c1_i32_17 = arith.constant 1 : i32
      %31 = vector.broadcast %c1_i32_17 : i32 to vector<8x128xi32>
      %32 = arith.cmpi eq, %28, %31 : vector<8x128xi32>
      %cst_18 = arith.constant 0.000000e+00 : f32
      %33 = vector.broadcast %27 : f32 to vector<8x128xf32>
      %34 = vector.broadcast %cst_18 : f32 to vector<8x128xf32>
      %35 = arith.select %32, %33, %34 : vector<8x128xi1>, vector<8x128xf32>
      %36 = vector.broadcast %22 : f32 to vector<8x128xf32>
      %37 = arith.select %30, %36, %35 : vector<8x128xi1>, vector<8x128xf32>
      %c0_19 = arith.constant 0 : index
      %c0_20 = arith.constant 0 : index
      %c0_21 = arith.constant 0 : index
      %38 = vector.load %arg4[%c0_19, %c0_20, %c0_21] : memref<1x8x128xf32, #tpu.memory_space<vmem>>, vector<1x8x128xf32>
      %39 = vector.shape_cast %38 : vector<1x8x128xf32> to vector<8x128xf32>
      %40 = vector.shape_cast %37 : vector<8x128xf32> to vector<1x8x128xf32>
      tpu.vector_store %arg4[%c0_19, %c0_20, %c0_21], %40 {strides = array<i32>} : memref<1x8x128xf32, #tpu.memory_space<vmem>>, vector<1x8x128xf32>,
    } else {
    }
    return
  }
  func.func @transform_0(%arg0: i32, %arg1: i32) -> (i32, i32) {
    %c1_i32 = arith.constant 1 : i32
    %0 = arith.muli %arg0, %c1_i32 : i32
    %1 = arith.addi %0, %arg1 : i32
    %c0_i32 = arith.constant 0 : i32
    %2 = arith.minsi %1, %c0_i32 : i32
    %c0_i32_0 = arith.constant 0 : i32
    %c0_i32_1 = arith.constant 0 : i32
    return %2, %c0_i32_0 : i32, i32
  }
  func.func @transform_1(%arg0: i32, %arg1: i32) -> (i32, i32) {
    %c1_i32 = arith.constant 1 : i32
    %0 = arith.muli %arg0, %c1_i32 : i32
    %1 = arith.addi %0, %arg1 : i32
    %c0_i32 = arith.constant 0 : i32
    %2 = arith.minsi %1, %c0_i32 : i32
    %c0_i32_0 = arith.constant 0 : i32
    %c0_i32_1 = arith.constant 0 : i32
    return %2, %c0_i32_0 : i32, i32
  }
  func.func @transform_2(%arg0: i32, %arg1: i32) -> (i32, i32, i32) {
    %c0_i32 = arith.constant 0 : i32
    %c0_i32_0 = arith.constant 0 : i32
    %c0_i32_1 = arith.constant 0 : i32
    return %arg0, %c0_i32, %c0_i32_0 : i32, i32, i32
  }
}

</mosaic_0001>

<llo_original>
// kernel: tpu_custom_call.1
$region0: #{tpu_custom_call.1}
  #allocation0 [shape = 'u32[]', space=smem, size = 0x4, offset = 0x4, fixed_abs, tag = 'smem constant byte address 0x4 - core index']
  #allocation1 [shape = 'u32[144,128]{1,0:T(1,128)}', space=vmem, size = 0x12000, scoped, tag = 'internal scratch']
  #allocation2 [shape = 'f32[8,128]{1,0:T(8,128)}', space=vmem, size = 0x1000, scoped, tag = 'scratch operand']
  #allocation3 [shape = 'f32[8,128]{1,0:T(8,128)}', space=vmem, size = 0x1000, scoped, tag = 'scratch operand']
  %s0 = inlined_call_operand.hbm [shape: f32[16,128], index: 0, kind: input, shape index: {}]
  %s1 = inlined_call_operand.hbm [shape: f32[16,128], index: 1, kind: input, shape index: {}]
  %s2 = inlined_call_operand.hbm [shape: f32[1,8,128], index: 2, kind: output, shape index: {}]
  %s3 = sld [smem:[#allocation0]]
  $region42: #{tpu_custom_call.1} parent=0
    _
  %s5 = ssub.s32 1, %s3
  %s6 = scalar_select 0, %s5, %s3
  $region1: #{tpu_custom_call.1} parent=0
    #allocation4 [shape = 'u8[8192]{0}', space=vmem, size = 0x2000, scoped, tag = 'input window, operand 0, single buffered']
    #allocation5 [shape = 's32[1]{0}', space=sflag, size = 0x4, scoped, tag = 'scoped memory for tpu_custom_call.1']
    #allocation6 [shape = 's32[1]{0}', space=sflag, size = 0x4, scoped, tag = 'scoped memory for tpu_custom_call.1']
    #allocation7 [shape = 'u8[8192]{0}', space=vmem, size = 0x2000, scoped, tag = 'input window, operand 1, single buffered']
    #allocation8 [shape = 's32[1]{0}', space=sflag, size = 0x4, scoped, tag = 'scoped memory for tpu_custom_call.1']
    #allocation9 [shape = 'u8[4096]{0}', space=vmem, size = 0x1000, scoped, tag = 'output window, operand 0, single buffered']
    %7 = vsyncpa [#allocation5], 0
    %8 = vsyncpa [#allocation8], 0
    %9 = vsyncpa [#allocation6], 0
    // Predicated region
    $region2: #{tpu_custom_call.1} parent=1 // pred_check
      _
    $region3: #{tpu_custom_call.1} parent=1 // pred_check_branch
      %11 = sbr.rel (0) target = $region5
    $region4: #{tpu_custom_call.1} parent=1 // pred_region
      %s12 = sadd.s32 0, 0
      %p13 = scmp.lt.s32.totalorder %s12, 0
      %s14 = scalar_select %p13, %s12, 0
      %s15 = smul.u32 2, %s14
      %s17 = ssub.s32 256, 256
      %18 = vsyncadd [#allocation5], %s17
      %s19 = smul.addr %s15, 128
      %s20 = scalar_lea.hbm %s0, %s19
      %s21 = sshll.u32 [#allocation4], 4
      %s22 = int_to_ptr.vmem [resolvable:$true] %s21
      %27 = dma.hbm_to_vmem [thread:$0]  %s20, 256, %s22, [#allocation5], 128, 128, 8
    $region5: #{tpu_custom_call.1} parent=1 // pred_fallthru
      _
    // Predicated region
    $region6: #{tpu_custom_call.1} parent=1 // pred_check
      _
    $region7: #{tpu_custom_call.1} parent=1 // pred_check_branch
      %29 = sbr.rel (0) target = $region9
    $region8: #{tpu_custom_call.1} parent=1 // pred_region
      %s30 = sadd.s32 0, 0
      %p31 = scmp.lt.s32.totalorder %s30, 0
      %s32 = scalar_select %p31, %s30, 0
      %s33 = smul.u32 2, %s32
      %s35 = ssub.s32 256, 256
      %36 = vsyncadd [#allocation8], %s35
      %s37 = smul.addr %s33, 128
      %s38 = scalar_lea.hbm %s1, %s37
      %s39 = sshll.u32 [#allocation7], 4
      %s40 = int_to_ptr.vmem [resolvable:$true] %s39
      %45 = dma.hbm_to_vmem [thread:$0]  %s38, 256, %s40, [#allocation8], 128, 128, 8
    $region9: #{tpu_custom_call.1} parent=1 // pred_fallthru
      _
    // Predicated region
    $region10: #{tpu_custom_call.1} parent=1 // pred_check
      _
    $region11: #{tpu_custom_call.1} parent=1 // pred_check_branch
      %47 = sbr.rel (0) target = $region13
    $region12: #{tpu_custom_call.1} parent=1 // pred_region
      %48 = dma.done [#allocation5], 256
    $region13: #{tpu_custom_call.1} parent=1 // pred_fallthru
      _
    // Predicated region
    $region14: #{tpu_custom_call.1} parent=1 // pred_check
      _
    $region15: #{tpu_custom_call.1} parent=1 // pred_check_branch
      %50 = sbr.rel (0) target = $region17
    $region16: #{tpu_custom_call.1} parent=1 // pred_region
      %51 = dma.done [#allocation8], 256
    $region17: #{tpu_custom_call.1} parent=1 // pred_fallthru
      _
    %s52 = sadd.s32 0, 0
    %p53 = scmp.lt.s32.totalorder %s52, 0
    %s54 = scalar_select %p53, %s52, 0
    %s55 = smul.u32 2, %s54
    %s56 = sadd.s32 0, 0
    %p57 = scmp.lt.s32.totalorder %s56, 0
    %s58 = scalar_select %p57, %s56, 0
    %s59 = smul.u32 2, %s58
    %p60 = scmp.eq.s32.totalorder 0, 0
    // Predicated region
    $region18: #{tpu_custom_call.1} parent=1 // pred_check
      %p61 = pneg %p60
    $region19: #{tpu_custom_call.1} parent=1 // pred_check_branch
      %63 = sbr.rel (%p61) target = $region21
    $region20: #{tpu_custom_call.1} parent=1 // pred_region
      %64 = vst [vmem:[#allocation2] sm:$0xff] 0.0
      %65 = vst [vmem:[#allocation3] sm:$0xff] 0.0
    $region21: #{tpu_custom_call.1} parent=1 // pred_fallthru
      _
    %s66 = sadd.s32 0, 0
    %s67 = smul.u32 %s66, 16
    %s68 = ssub.s32 16, %s67
    %v69 = vld [vmem:[#allocation4] sm:$0xff]
    %v70 = vld [vmem:[#allocation4 + $0x8] sm:$0xff]
    %v71 = vld [vmem:[#allocation7] sm:$0xff]
    %v72 = vld [vmem:[#allocation7 + $0x8] sm:$0xff]
    %p73 = scmp.ge.s32.totalorder %s68, 16
    // Predicated region
    $region22: #{tpu_custom_call.1} parent=1 // pred_check
      %p74 = pneg %p73
    $region23: #{tpu_custom_call.1} parent=1 // pred_check_branch
      %76 = sbr.rel (%p74) target = $region25
    $region24: #{tpu_custom_call.1} parent=1 // pred_region
      %v77 = vld [vmem:[#allocation2] sm:$0xff]
      %v78 = vmul.f32 %v69, %v71
      %v79 = vmul.f32 %v70, %v72
      %v80 = vadd.f32 %v78, %v79
      %v81 = vadd.f32 %v77, %v80
      %82 = vst [vmem:[#allocation2] sm:$0xff] %v81
      %v83 = vld [vmem:[#allocation3] sm:$0xff]
      %v84 = vadd.f32 %v69, %v71
      %v85 = vadd.f32 %v70, %v72
      %v86 = vadd.f32 %v84, %v85
      %v87 = vadd.f32 %v83, %v86
      %88 = vst [vmem:[#allocation3] sm:$0xff] %v87
    $region25: #{tpu_custom_call.1} parent=1 // pred_fallthru
      _
    %p89 = scmp.lt.s32.totalorder %s68, 16
    // Predicated region
    $region26: #{tpu_custom_call.1} parent=1 // pred_check
      %p90 = pneg %p89
    $region27: #{tpu_custom_call.1} parent=1 // pred_check_branch
      %92 = sbr.rel (%p90) target = $region29
    $region28: #{tpu_custom_call.1} parent=1 // pred_region
      %v93 = vlaneseq
      %v94 = vshrl.u32 %v93, 7
      %v95 = vadd.s32 %v94, 8
      %v96 = vstv %s68
      %vm97 = vcmp.lt.s32.totalorder %v94, %v96
      %vm98 = vcmp.lt.s32.totalorder %v95, %v96
      %v99 = vld [vmem:[#allocation2] sm:$0xff]
      %v100 = vmul.f32 %v69, %v71
      %v101 = vmul.f32 %v70, %v72
      %v102 = vsel %vm97, %v100, 0.0
      %v103 = vsel %vm98, %v101, 0.0
      %v104 = vadd.f32 %v102, %v103
      %v105 = vadd.f32 %v99, %v104
      %106 = vst [vmem:[#allocation2] sm:$0xff] %v105
      %v107 = vld [vmem:[#allocation3] sm:$0xff]
      %v108 = vadd.f32 %v69, %v71
      %v109 = vadd.f32 %v70, %v72
      %v110 = vsel %vm97, %v108, 0.0
      %v111 = vsel %vm98, %v109, 0.0
      %v112 = vadd.f32 %v110, %v111
      %v113 = vadd.f32 %v107, %v112
      %114 = vst [vmem:[#allocation3] sm:$0xff] %v113
    $region29: #{tpu_custom_call.1} parent=1 // pred_fallthru
      _
    // Predicated region
    $region30: #{tpu_custom_call.1} parent=1 // pred_check
      %p115 = pneg %p60
    $region31: #{tpu_custom_call.1} parent=1 // pred_check_branch
      %117 = sbr.rel (%p115) target = $region33
    $region32: #{tpu_custom_call.1} parent=1 // pred_region
      %v118 = vld [vmem:[#allocation2] sm:$0xff]
      %119 = vadd.xlane.f32.xlu0 %v118
      %v120 = vpop.xlane.xlu0 %119
      %v121 = vrot.slane %v120, 4
      %v122 = vadd.f32 %v120, %v121
      %v123 = vrot.slane %v122, 2
      %v124 = vadd.f32 %v122, %v123
      %v125 = vrot.slane %v124, 1
      %v126 = vadd.f32 %v124, %v125
      %s127 = vtos %v126
      %v128 = vld [vmem:[#allocation3] sm:$0xff]
      %129 = vadd.xlane.f32.xlu0 %v128
      %v130 = vpop.xlane.xlu0 %129
      %v131 = vrot.slane %v130, 4
      %v132 = vadd.f32 %v130, %v131
      %v133 = vrot.slane %v132, 2
      %v134 = vadd.f32 %v132, %v133
      %v135 = vrot.slane %v134, 1
      %v136 = vadd.f32 %v134, %v135
      %s137 = vtos %v136
      %v138 = vlaneseq
      %v139 = vshrl.u32 %v138, 7
      %vm140 = vcmp.eq.s32.totalorder %v139, 0
      %vm141 = vcmp.eq.s32.totalorder %v139, 1
      %v142 = vstv %s137
      %v143 = vsel %vm141, %v142, 0.0
      %v144 = vstv %s127
      %v145 = vsel %vm140, %v144, %v143
      %146 = vst [vmem:[#allocation9] sm:$0xff] %v145
    $region33: #{tpu_custom_call.1} parent=1 // pred_fallthru
      _
    // Predicated region
    $region34: #{tpu_custom_call.1} parent=1 // pred_check
      _
    $region35: #{tpu_custom_call.1} parent=1 // pred_check_branch
      %148 = sbr.rel (0) target = $region37
    $region36: #{tpu_custom_call.1} parent=1 // pred_region
      %s150 = ssub.s32 128, 128
      %151 = vsyncadd [#allocation6], %s150
      %s153 = sshll.u32 [#allocation9], 4
      %s154 = int_to_ptr.vmem [resolvable:$true] %s153
      %156 = dma.vmem_to_hbm [thread:$0]  %s154, 128, %s2, [#allocation6]
    $region37: #{tpu_custom_call.1} parent=1 // pred_fallthru
      _
    // Predicated region
    $region38: #{tpu_custom_call.1} parent=1 // pred_check
      _
    $region39: #{tpu_custom_call.1} parent=1 // pred_check_branch
      %158 = sbr.rel (0) target = $region41
    $region40: #{tpu_custom_call.1} parent=1 // pred_region
      %159 = dma.done [#allocation6], 128
    $region41: #{tpu_custom_call.1} parent=1 // pred_fallthru
      _
    %160 = vsyncpa [#allocation5], 1
    %161 = vsyncpa [#allocation8], 1
    %162 = vsyncpa [#allocation6], 1

</llo_original>
